<compile_context>
chip_gen: v7x
topology: tpu7x:2x2x1
jax: 0.10.0
libtpu: 0.0.40
codegen_flags: <defaults>
</compile_context>

<pallas_src>
import functools

import jax
import jax.numpy as jnp
import numpy as np
from jax import lax
from jax.experimental import pallas as pl
from jax.experimental.pallas import tpu as pltpu

_TILE_C = 128          # "query" pixels per tile (sublane axis of the compare)
_ROW_CHUNK = 128       # swept pixels per inner-loop chunk (lane axis / MXU K)
_MAX_ROW_BLOCK = 4096  # swept pixels per grid step along the "arbitrary" axis


def _count_kernel(vals_col_ref, vals_row_ref, out_ref, *, row_chunk):
    """out[i] += #{ j in this row block : (v_j, j) < (v_i, i) lexicographically }."""
    tile_c = vals_col_ref.shape[0]
    row_block = vals_row_ref.shape[1]
    n_chunks = row_block // row_chunk

    ci = pl.program_id(0)
    rj = pl.program_id(1)

    @pl.when(rj == 0)
    def _():
        out_ref[...] = jnp.zeros_like(out_ref)

    # Tile-side values / indices live on sublanes: (TILE_C, 1).
    v_i = vals_col_ref[...]
    i_idx = ci * tile_c + lax.broadcasted_iota(jnp.int32, (tile_c, 1), 0)
    # Swept-side base index lives on lanes: (1, ROW_CHUNK).  Hoisted out of the
    # chunk loop (JAX does not CSE iota / broadcast_in_dim).
    j_base = rj * row_block + lax.broadcasted_iota(jnp.int32, (1, row_chunk), 1)
    ones_rhs = jnp.ones((row_chunk, 128), dtype=jnp.bfloat16)          # hoisted

    def body(c, acc):
        start = pl.multiple_of(c * row_chunk, row_chunk)
        v_j = vals_row_ref[:, pl.ds(start, row_chunk)]                 # (1, RC) lane-dense
        j_idx = j_base + start
        prec = (v_j < v_i) | ((v_j == v_i) & (j_idx < i_idx))          # (TILE_C, RC)
        # 0/1 count reduction over lanes on the otherwise-idle MXU; exact f32 acc.
        return acc + jnp.dot(prec.astype(jnp.bfloat16), ones_rhs,
                             preferred_element_type=jnp.float32)

    if n_chunks <= 4:
        unroll = n_chunks
    elif n_chunks % 4 == 0:
        unroll = 4
    elif n_chunks % 2 == 0:
        unroll = 2
    else:
        unroll = 1
    acc = lax.fori_loop(0, n_chunks, body,
                        jnp.zeros((tile_c, 128), jnp.float32),
                        unroll=unroll)
    out_ref[...] += acc[:, 0:1]


def _vmem_limit_bytes():
    # Leave headroom; ~96 MiB on v5e/v6e (128 MiB physical), <=56 MiB on v7x.
    try:
        cap = int(pltpu.get_tpu_info().vmem_capacity_bytes)
    except Exception:
        cap = 64 * 1024 * 1024
    return int(min(cap - 8 * 1024 * 1024, 96 * 1024 * 1024))


def _precede_count(vals_flat, row_block, *, tile_c=_TILE_C, row_chunk=_ROW_CHUNK):
    """For every pixel i: #{j : (v_j, j) < (v_i, i)} as exact-integer float32."""
    n_pad = vals_flat.shape[0]
    n_tiles = n_pad // tile_c
    n_row_blocks = n_pad // row_block
    vals_col = vals_flat.reshape(n_pad, 1)    # tile-side view (sublane-dense blocks)
    vals_row = vals_flat.reshape(1, n_pad)    # swept-side view (lane-dense blocks)

    counts = pl.pallas_call(
        functools.partial(_count_kernel, row_chunk=row_chunk),
        out_shape=jax.ShapeDtypeStruct((n_pad, 1), jnp.float32),
        grid=(n_tiles, n_row_blocks),
        in_specs=[
            pl.BlockSpec((tile_c, 1), lambda ci, rj: (ci, 0)),       # this tile's pixels
            pl.BlockSpec((1, row_block), lambda ci, rj: (0, rj)),    # swept pixels
        ],
        out_specs=pl.BlockSpec((tile_c, 1), lambda ci, rj: (ci, 0)),  # accumulator
        compiler_params=pltpu.CompilerParams(
            dimension_semantics=("parallel", "arbitrary"),
            vmem_limit_bytes=_vmem_limit_bytes(),
        ),
    )(vals_col, vals_row)
    return counts.reshape(n_pad)


def stbg_forward(cam, bg, key, nbr_bg, min_):
    """Pallas version of _STBG(nbr_bg, min_).forward(cam, bg).  cam, bg: (H, W)."""
    assert cam.ndim == 2 and bg.shape == cam.shape
    h, w = cam.shape
    n = h * w

    # Pad the flattened pixel axis so both the tile axis and the row-block axis
    # divide it evenly; padded pixels get cam = +inf so they rank last.
    n_pad = ((n + _TILE_C - 1) // _TILE_C) * _TILE_C
    if n_pad > _MAX_ROW_BLOCK:
        n_pad = ((n_pad + _MAX_ROW_BLOCK - 1) // _MAX_ROW_BLOCK) * _MAX_ROW_BLOCK
        row_block = _MAX_ROW_BLOCK
    else:
        row_block = n_pad
    pad = n_pad - n
    assert n_pad < (1 << 24)   # f32 count accumulation stays exact

    cam_flat = cam.astype(jnp.float32).reshape(n)
    # torch.sort sends NaNs to the end of an ascending sort -> map them to +inf.
    cam_flat = jnp.where(jnp.isnan(cam_flat), jnp.inf, cam_flat)
    cam_flat = jnp.pad(cam_flat, (0, pad), constant_values=jnp.inf)

    # ---- pass 1: stable ascending rank of every pixel -----------------------
    rank = _precede_count(cam_flat, row_block)

    nbr_bg_eff = min(max(int(nbr_bg), 0), n)
    min_eff = max(int(min_), 0)
    cand = rank < nbr_bg_eff                              # candidate pixels

    # Uniform random scores replace torch.multinomial (uniform, no replacement);
    # drawn only for real pixels so the draw is independent of padding.
    scr = jax.random.uniform(key, (n,), dtype=jnp.float32)
    scr = jnp.pad(scr, (0, pad), constant_values=2.0)
    # Non-candidates get a sentinel above any uniform [0,1) draw (plain XLA op).
    scr_masked = jnp.where(cand, scr, jnp.float32(2.0))

    # ---- pass 2: rank the candidates' scores; min_ lowest become background -
    srank = _precede_count(scr_masked, row_block)
    selected = cand & (srank < min_eff)

    bg_flat = jnp.pad(bg.reshape(n), (0, pad))
    out = jnp.where(selected, jnp.ones_like(bg_flat), bg_flat)
    return out[:n].reshape(h, w)


def _check(cam, bg, out, nbr_bg, min_):
    cam_np = np.asarray(cam, dtype=np.float64).reshape(-1)
    bg_np = np.asarray(bg).reshape(-1)
    out_np = np.asarray(out).reshape(-1)
    n = cam_np.size
    k_bg = min(max(nbr_bg, 0), n)
    lowest = set(np.argsort(cam_np, kind="stable")[:k_bg].tolist())
    newly = np.where((out_np == 1.0) & (bg_np == 0.0))[0]
    assert np.all(out_np >= bg_np)                       # bg only ever grows
    assert np.all(out_np[bg_np == 1.0] == 1.0)           # existing bg preserved
    assert all(int(i) in lowest for i in newly)          # only lowest-cam pixels
    assert len(newly) <= max(min(min_, k_bg), 0)         # at most min_ new picks


if __name__ == "__main__":
    key = jax.random.PRNGKey(0)
    k_cam, k_bg, k_sel, k_cam2, k_bg2, k_sel2 = jax.random.split(key, 6)

    # main case: 16x16 CAM, nbr_bg=40 lowest pixels, pick min_=10 of them
    H, W, NBR_BG, MIN_ = 16, 16, 40, 10
    cam = jax.random.uniform(k_cam, (H, W), dtype=jnp.float32)
    bg = (jax.random.uniform(k_bg, (H, W)) < 0.1).astype(jnp.float32)
    out = jax.block_until_ready(stbg_forward(cam, bg, k_sel, NBR_BG, MIN_))
    _check(cam, bg, out, NBR_BG, MIN_)

    # ragged / padded case (10*9 = 90 pixels -> padded to 128) with nbr_bg > N
    H2, W2 = 10, 9
    cam2 = jax.random.uniform(k_cam2, (H2, W2), dtype=jnp.float32)
    bg2 = (jax.random.uniform(k_bg2, (H2, W2)) < 0.1).astype(jnp.float32)
    out2 = jax.block_until_ready(stbg_forward(cam2, bg2, k_sel2, 200, 7))
    _check(cam2, bg2, out2, 200, 7)

    # nbr_bg == 0 -> bg must pass through untouched
    out3 = jax.block_until_ready(stbg_forward(cam, bg, k_sel, 0, MIN_))
    assert np.array_equal(np.asarray(out3), np.asarray(bg))

    print("KERNEL_OK")
</pallas_src>

<mosaic_0001>
module attributes {stable_mosaic.version = 11 : i64} {
  func.func @_count_kernel(%arg0: i32, %arg1: i32, %arg2: memref<128x1xf32, #tpu.memory_space<vmem>>, %arg3: memref<1x256xf32, #tpu.memory_space<vmem>>, %arg4: memref<128x1xf32, #tpu.memory_space<vmem>>) attributes {dimension_semantics = [#tpu.dimension_semantics<parallel>, #tpu.dimension_semantics<arbitrary>], iteration_bounds = array<i64: 2, 1>, scalar_prefetch = 0 : i64, scratch_operands = 0 : i64, tpu.core_type = #tpu.core_type<tc>, window_params = [{transform_indices = @transform_0, window_bounds = array<i64: 128, 1>}, {transform_indices = @transform_1, window_bounds = array<i64: 1, 256>}, {transform_indices = @transform_2, window_bounds = array<i64: 128, 1>}]} {
    %c0_i32 = arith.constant 0 : i32
    %0 = arith.cmpi eq, %arg1, %c0_i32 : i32
    %1 = arith.extui %0 : i1 to i32
    %c0_i32_0 = arith.constant 0 : i32
    %2 = arith.cmpi ne, %1, %c0_i32_0 : i32
    scf.if %2 {
      %cst_14 = arith.constant 0.000000e+00 : f32
      %62 = vector.broadcast %cst_14 : f32 to vector<128x1xf32>
      %c0_15 = arith.constant 0 : index
      %c0_16 = arith.constant 0 : index
      %63 = vector.load %arg4[%c0_15, %c0_16] : memref<128x1xf32, #tpu.memory_space<vmem>>, vector<128x1xf32>
      tpu.vector_store %arg4[%c0_15, %c0_16], %62 {strides = array<i32>} : memref<128x1xf32, #tpu.memory_space<vmem>>, vector<128x1xf32>,
    } else {
    }
    %c0 = arith.constant 0 : index
    %c0_1 = arith.constant 0 : index
    %3 = vector.load %arg2[%c0, %c0_1] : memref<128x1xf32, #tpu.memory_space<vmem>>, vector<128x1xf32>
    %c128_i32 = arith.constant 128 : i32
    %4 = arith.muli %arg0, %c128_i32 : i32
    %5 = tpu.iota {dimensions = array<i32: 0>} : vector<128x1xi32>
    %6 = vector.broadcast %4 : i32 to vector<128x1xi32>
    %7 = arith.addi %6, %5 : vector<128x1xi32>
    %c256_i32 = arith.constant 256 : i32
    %8 = arith.muli %arg1, %c256_i32 : i32
    %9 = tpu.iota {dimensions = array<i32: 1>} : vector<1x128xi32>
    %10 = vector.broadcast %8 : i32 to vector<1x128xi32>
    %11 = arith.addi %10, %9 : vector<1x128xi32>
    %cst = arith.constant 1.000000e+00 : bf16
    %12 = vector.broadcast %cst : bf16 to vector<128x128xbf16>
    %cst_2 = arith.constant 0.000000e+00 : f32
    %13 = vector.broadcast %cst_2 : f32 to vector<128x128xf32>
    %c0_i32_3 = arith.constant 0 : i32
    %c128_i32_4 = arith.constant 128 : i32
    %14 = arith.muli %c0_i32_3, %c128_i32_4 : i32
    %15 = tpu.assume_multiple %14, 128 : i32
    %c0_5 = arith.constant 0 : index
    %16 = arith.index_cast %15 : i32 to index
    %17 = vector.load %arg3[%c0_5, %16] : memref<1x256xf32, #tpu.memory_space<vmem>>, vector<1x128xf32>
    %18 = vector.broadcast %15 : i32 to vector<1x128xi32>
    %19 = arith.addi %11, %18 : vector<1x128xi32>
    %20 = vector.broadcast %17 : vector<1x128xf32> to vector<128x128xf32>
    %21 = vector.broadcast %3 : vector<128x1xf32> to vector<128x128xf32>
    %22 = arith.cmpf olt, %20, %21 : vector<128x128xf32>
    %23 = vector.broadcast %17 : vector<1x128xf32> to vector<128x128xf32>
    %24 = vector.broadcast %3 : vector<128x1xf32> to vector<128x128xf32>
    %25 = arith.cmpf oeq, %23, %24 : vector<128x128xf32>
    %26 = vector.broadcast %19 : vector<1x128xi32> to vector<128x128xi32>
    %27 = vector.broadcast %7 : vector<128x1xi32> to vector<128x128xi32>
    %28 = arith.cmpi slt, %26, %27 : vector<128x128xi32>
    %29 = arith.andi %25, %28 : vector<128x128xi1>
    %30 = arith.ori %22, %29 : vector<128x128xi1>
    %31 = arith.extui %30 : vector<128x128xi1> to vector<128x128xi32>
    %32 = arith.sitofp %31 : vector<128x128xi32> to vector<128x128xf32>
    %33 = arith.truncf %32 : vector<128x128xf32> to vector<128x128xbf16>
    %cst_6 = arith.constant dense<0.000000e+00> : vector<128x128xf32>
    %34 = tpu.matmul %33, %12, %cst_6 {dimension_numbers = #tpu.dot_dimension_numbers<[1], [0], [0], [1], [0, 0, 1, 1], [], []>} : vector<128x128xbf16>, vector<128x128xbf16>, vector<128x128xf32> -> vector<128x128xf32>
    %35 = arith.addf %13, %34 : vector<128x128xf32>
    %c1_i32 = arith.constant 1 : i32
    %c128_i32_7 = arith.constant 128 : i32
    %36 = arith.muli %c1_i32, %c128_i32_7 : i32
    %37 = tpu.assume_multiple %36, 128 : i32
    %c0_8 = arith.constant 0 : index
    %38 = arith.index_cast %37 : i32 to index
    %39 = vector.load %arg3[%c0_8, %38] : memref<1x256xf32, #tpu.memory_space<vmem>>, vector<1x128xf32>
    %40 = vector.broadcast %37 : i32 to vector<1x128xi32>
    %41 = arith.addi %11, %40 : vector<1x128xi32>
    %42 = vector.broadcast %39 : vector<1x128xf32> to vector<128x128xf32>
    %43 = vector.broadcast %3 : vector<128x1xf32> to vector<128x128xf32>
    %44 = arith.cmpf olt, %42, %43 : vector<128x128xf32>
    %45 = vector.broadcast %39 : vector<1x128xf32> to vector<128x128xf32>
    %46 = vector.broadcast %3 : vector<128x1xf32> to vector<128x128xf32>
    %47 = arith.cmpf oeq, %45, %46 : vector<128x128xf32>
    %48 = vector.broadcast %41 : vector<1x128xi32> to vector<128x128xi32>
    %49 = vector.broadcast %7 : vector<128x1xi32> to vector<128x128xi32>
    %50 = arith.cmpi slt, %48, %49 : vector<128x128xi32>
    %51 = arith.andi %47, %50 : vector<128x128xi1>
    %52 = arith.ori %44, %51 : vector<128x128xi1>
    %53 = arith.extui %52 : vector<128x128xi1> to vector<128x128xi32>
    %54 = arith.sitofp %53 : vector<128x128xi32> to vector<128x128xf32>
    %55 = arith.truncf %54 : vector<128x128xf32> to vector<128x128xbf16>
    %cst_9 = arith.constant dense<0.000000e+00> : vector<128x128xf32>
    %56 = tpu.matmul %55, %12, %cst_9 {dimension_numbers = #tpu.dot_dimension_numbers<[1], [0], [0], [1], [0, 0, 1, 1], [], []>} : vector<128x128xbf16>, vector<128x128xbf16>, vector<128x128xf32> -> vector<128x128xf32>
    %57 = arith.addf %35, %56 : vector<128x128xf32>
    %c2_i32 = arith.constant 2 : i32
    %c0_10 = arith.constant 0 : index
    %c0_11 = arith.constant 0 : index
    %58 = vector.load %arg4[%c0_10, %c0_11] : memref<128x1xf32, #tpu.memory_space<vmem>>, vector<128x1xf32>
    %59 = vector.extract_strided_slice %57 {offsets = [0, 0], sizes = [128, 1], strides = [1, 1]} : vector<128x128xf32> to vector<128x1xf32>
    %60 = arith.addf %58, %59 : vector<128x1xf32>
    %c0_12 = arith.constant 0 : index
    %c0_13 = arith.constant 0 : index
    %61 = vector.load %arg4[%c0_12, %c0_13] : memref<128x1xf32, #tpu.memory_space<vmem>>, vector<128x1xf32>
    tpu.vector_store %arg4[%c0_12, %c0_13], %60 {strides = array<i32>} : memref<128x1xf32, #tpu.memory_space<vmem>>, vector<128x1xf32>,
    return
  }
  func.func @transform_0(%arg0: i32, %arg1: i32) -> (i32, i32) {
    %c0_i32 = arith.constant 0 : i32
    %c0_i32_0 = arith.constant 0 : i32
    return %arg0, %c0_i32 : i32, i32
  }
  func.func @transform_1(%arg0: i32, %arg1: i32) -> (i32, i32) {
    %c0_i32 = arith.constant 0 : i32
    %c0_i32_0 = arith.constant 0 : i32
    return %c0_i32, %arg1 : i32, i32
  }
  func.func @transform_2(%arg0: i32, %arg1: i32) -> (i32, i32) {
    %c0_i32 = arith.constant 0 : i32
    %c0_i32_0 = arith.constant 0 : i32
    return %arg0, %c0_i32 : i32, i32
  }
}

</mosaic_0001>

<llo_original>
// kernel: tpu_custom_call.1
$region0: #{tpu_custom_call.1}
  #allocation0 [shape = 'u32[]', space=smem, size = 0x4, offset = 0x4, fixed_abs, tag = 'smem constant byte address 0x4 - core index']
  #allocation1 [shape = 'u32[144,128]{1,0:T(1,128)}', space=vmem, size = 0x12000, scoped, tag = 'internal scratch']
  %s0 = inlined_call_operand.vmem [shape: f32[256,1], index: 0, kind: input, shape index: {}]
  %s1 = inlined_call_operand.vmem [shape: f32[1,256], index: 1, kind: input, shape index: {}]
  %s2 = inlined_call_operand.vmem [shape: f32[256,1], index: 2, kind: output, shape index: {}]
  %s3 = sld [smem:[#allocation0]]
  $region45: #{tpu_custom_call.1} parent=0
    _
  %s5 = ssub.s32 1, %s3
  %s6 = scalar_select 0, %s5, %s3
  loop: start=0, step=1, limit=4
  $region2: #{tpu_custom_call.1} parent=0 // loop_pre_header
    _
  $region3: #{tpu_custom_call.1} parent=0 // loop_header
    %s8 = sphi 0, %s12
    %p9 = scmp.ge.s32.totalorder %s8, 4
    %s15 = sphi 0, %s27
    %s16 = sphi 0, %s23
    %s17 = sphi 0, %s15
    %s18 = sphi 0, %s16
    %s19 = sphi 0, %s17
    %s20 = sphi 0, %s18
    %s30 = sphi 0, %s32
    %s33 = sphi 0, %s30
    %s34 = sphi 0, %s33
    %s50 = sphi 0, %s34
    %s56 = sphi 0, %s58
    %s59 = sphi 0, %s56
    %s60 = sphi 0, %s59
    %s76 = sphi 0, %s60
    %s82 = sphi 0, %s84
    %s85 = sphi 0, %s82
    %s86 = sphi 0, %s85
    %s102 = sphi 0, %s86
  $region4: #{tpu_custom_call.1} parent=0 // loop_header_branch
    %11 = sbr.rel (%p9) target = $region8
  $region5: #{tpu_custom_call.1} parent=0 // loop_body
    %s13 = ssub.s32 %s8, 1
    %s14 = ssub.s32 %s8, 2
    %s21 = sadd.s32 1, %s16
    %p22 = scmp.ge.s32.totalorder %s21, 1
    %s23 = scalar_select %p22, 0, %s21
    %s24 = sadd.s32 1, %s15
    %s25 = scalar_select %p22, %s24, %s15
    %p26 = scmp.ge.s32.totalorder %s25, 2
    %s27 = scalar_select %p26, 0, %s25
    %s28 = ssub.s32 %s15, %s27
    %p29 = scmp.eq.s32.totalorder %s28, 0
    %s31 = sadd.s32 %s30, 1
    %s32 = scalar_select %p29, %s30, %s31
    %p35 = pneg %p29
    %p36 = scmp.eq.s32.totalorder %s8, 1
    %p37 = por %p35, %p36
    %p38 = scmp.ne.s32.totalorder %s30, %s33
    %p39 = scmp.eq.s32.totalorder %s8, 0
    %p40 = por %p38, %p39
    %p41 = scmp.ne.s32.totalorder %s30, %s33
    %p42 = scmp.eq.s32.totalorder %s13, 1
    %p43 = por %p41, %p42
    %p44 = scmp.ne.s32.totalorder %s33, %s34
    %p45 = scmp.eq.s32.totalorder %s13, 0
    %p46 = por %p44, %p45
    %p47 = scmp.ne.s32.totalorder %s33, %s34
    %p48 = scmp.eq.s32.totalorder %s14, 1
    %p49 = por %p47, %p48
    %p51 = scmp.ne.s32.totalorder %s34, %s50
    %p52 = scmp.eq.s32.totalorder %s14, 0
    %p53 = por %p51, %p52
    %s54 = ssub.s32 %s16, %s23
    %p55 = scmp.eq.s32.totalorder %s54, 0
    %s57 = sadd.s32 %s56, 1
    %s58 = scalar_select %p55, %s56, %s57
    %p61 = pneg %p55
    %p62 = scmp.eq.s32.totalorder %s8, 1
    %p63 = por %p61, %p62
    %p64 = scmp.ne.s32.totalorder %s56, %s59
    %p65 = scmp.eq.s32.totalorder %s8, 0
    %p66 = por %p64, %p65
    %p67 = scmp.ne.s32.totalorder %s56, %s59
    %p68 = scmp.eq.s32.totalorder %s13, 1
    %p69 = por %p67, %p68
    %p70 = scmp.ne.s32.totalorder %s59, %s60
    %p71 = scmp.eq.s32.totalorder %s13, 0
    %p72 = por %p70, %p71
    %p73 = scmp.ne.s32.totalorder %s59, %s60
    %p74 = scmp.eq.s32.totalorder %s14, 1
    %p75 = por %p73, %p74
    %p77 = scmp.ne.s32.totalorder %s60, %s76
    %p78 = scmp.eq.s32.totalorder %s14, 0
    %p79 = por %p77, %p78
    %s80 = ssub.s32 %s15, %s27
    %p81 = scmp.eq.s32.totalorder %s80, 0
    %s83 = sadd.s32 %s82, 1
    %s84 = scalar_select %p81, %s82, %s83
    %p87 = pneg %p81
    %p88 = scmp.eq.s32.totalorder %s8, 1
    %p89 = por %p87, %p88
    %p90 = scmp.ne.s32.totalorder %s82, %s85
    %p91 = scmp.eq.s32.totalorder %s8, 0
    %p92 = por %p90, %p91
    %p93 = scmp.ne.s32.totalorder %s82, %s85
    %p94 = scmp.eq.s32.totalorder %s13, 1
    %p95 = por %p93, %p94
    %p96 = scmp.ne.s32.totalorder %s85, %s86
    %p97 = scmp.eq.s32.totalorder %s13, 0
    %p98 = por %p96, %p97
    %p99 = scmp.ne.s32.totalorder %s85, %s86
    %p100 = scmp.eq.s32.totalorder %s14, 1
    %p101 = por %p99, %p100
    %p103 = scmp.ne.s32.totalorder %s86, %s102
    %p104 = scmp.eq.s32.totalorder %s14, 0
    %p105 = por %p103, %p104
    %p106 = scmp.le.s32.totalorder 1, %s8
    %p107 = scmp.lt.s32.totalorder %s8, 3
    %p108 = pnand %p106, %p107
    %p109 = pneg %p108
    // Predicated region
    $region9: #{tpu_custom_call.1} parent=5 // pred_check
      _
    $region10: #{tpu_custom_call.1} parent=5 // pred_check_branch
      %111 = sbr.rel (%p108) target = $region12
    $region11: #{tpu_custom_call.1} parent=5 // pred_region
      %s112 = ssub.s32 %s8, 1
      // Predicated region
      $region13: #{tpu_custom_call.1} parent=11 // pred_check
        %p113 = pneg %p72
      $region14: #{tpu_custom_call.1} parent=11 // pred_check_branch
        %115 = sbr.rel (%p113) target = $region16
      $region15: #{tpu_custom_call.1} parent=11 // pred_region
        %s116 = smul.u32 2, %s18
        %p117 = scmp.lt.s32.totalorder %s116, 1
        %s118 = scalar_select %p117, %s116, 1
        %s119 = scalar_lea.vmem %s1, %s118
        %s120 = smul.u32 2, %s18
      $region16: #{tpu_custom_call.1} parent=11 // pred_fallthru
        _
    $region12: #{tpu_custom_call.1} parent=5 // pred_fallthru
      _
    %p121 = scmp.lt.s32.totalorder %s8, 2
    // Predicated region
    $region17: #{tpu_custom_call.1} parent=5 // pred_check
      %p122 = pneg %p121
    $region18: #{tpu_custom_call.1} parent=5 // pred_check_branch
      %124 = sbr.rel (%p122) target = $region20
    $region19: #{tpu_custom_call.1} parent=5 // pred_region
      // Predicated region
      $region21: #{tpu_custom_call.1} parent=19 // pred_check
        %p125 = pneg %p40
      $region22: #{tpu_custom_call.1} parent=19 // pred_check_branch
        %127 = sbr.rel (%p125) target = $region24
      $region23: #{tpu_custom_call.1} parent=19 // pred_region
        %s128 = smul.u32 16, %s15
        %p129 = scmp.lt.s32.totalorder %s128, 31
        %s130 = scalar_select %p129, %s128, 31
        %s131 = smul.addr %s130, 8
        %s132 = scalar_lea.vmem %s0, %s131
        %s133 = smul.u32 16, %s15
      $region24: #{tpu_custom_call.1} parent=19 // pred_fallthru
        _
    $region20: #{tpu_custom_call.1} parent=5 // pred_fallthru
      _
    %p134 = scmp.le.s32.totalorder 1, %s8
    %p135 = scmp.lt.s32.totalorder %s8, 3
    %p136 = pnand %p134, %p135
    %p137 = pneg %p136
    // Predicated region
    $region25: #{tpu_custom_call.1} parent=5 // pred_check
      _
    $region26: #{tpu_custom_call.1} parent=5 // pred_check_branch
      %139 = sbr.rel (%p136) target = $region28
    $region27: #{tpu_custom_call.1} parent=5 // pred_region
      %s140 = ssub.s32 %s8, 1
      %s141 = smul.u32 16, %s17
      %p142 = scmp.lt.s32.totalorder %s141, 31
      %s143 = scalar_select %p142, %s141, 31
      %s144 = smul.addr %s143, 8
      %s145 = scalar_lea.vmem %s0, %s144
      %p146 = pneg %p46
      %p147 = pneg %p43
      %s148 = smul.u32 2, %s18
      %p149 = scmp.lt.s32.totalorder %s148, 1
      %s150 = scalar_select %p149, %s148, 1
      %s151 = scalar_lea.vmem %s1, %s150
      %p152 = pneg %p72
      %p153 = pneg %p69
      %p154 = pneg %p98
      %p155 = pneg %p95
      %s156 = smul.u32 16, %s17
      %p157 = scmp.lt.s32.totalorder %s156, 31
      %s158 = scalar_select %p157, %s156, 31
      %s159 = smul.addr %s158, 8
      %s160 = scalar_lea.vmem %s2, %s159
      %s161 = smul.u32 16, %s17
      %p162 = scmp.lt.s32.totalorder %s161, 31
      %s163 = scalar_select %p162, %s161, 31
      %s164 = smul.addr %s163, 8
      %s165 = scalar_lea.vmem %s0, %s164
      %s166 = smul.u32 16, %s17
      %s167 = smul.u32 2, %s18
      %p168 = scmp.lt.s32.totalorder %s167, 1
      %s169 = scalar_select %p168, %s167, 1
      %s170 = scalar_lea.vmem %s1, %s169
      %s171 = smul.u32 2, %s18
      %s172 = smul.u32 16, %s17
      %p173 = scmp.lt.s32.totalorder %s172, 31
      %s174 = scalar_select %p173, %s172, 31
      %s175 = smul.addr %s174, 8
      %s176 = scalar_lea.vmem %s2, %s175
      %s177 = smul.u32 16, %s17
      %p180 = scmp.eq.s32.totalorder %s18, 0
      // Predicated region
      $region29: #{tpu_custom_call.1} parent=27 // pred_check
        %p181 = pneg %p180
      $region30: #{tpu_custom_call.1} parent=27 // pred_check_branch
        %183 = sbr.rel (%p181) target = $region32
      $region31: #{tpu_custom_call.1} parent=27 // pred_region
        %vm184 = vcmask 7168
        %185 = vst.msk [vmem:[%s176] sm:$0xff] %vm184, 0.0
        %186 = vst.msk [vmem:[%s176 + $0x8] sm:$0xff] %vm184, 0.0
        %187 = vst.msk [vmem:[%s176 + $0x10] sm:$0xff] %vm184, 0.0
        %188 = vst.msk [vmem:[%s176 + $0x18] sm:$0xff] %vm184, 0.0
        %189 = vst.msk [vmem:[%s176 + $0x20] sm:$0xff] %vm184, 0.0
        %190 = vst.msk [vmem:[%s176 + $0x28] sm:$0xff] %vm184, 0.0
        %191 = vst.msk [vmem:[%s176 + $0x30] sm:$0xff] %vm184, 0.0
        %192 = vst.msk [vmem:[%s176 + $0x38] sm:$0xff] %vm184, 0.0
        %193 = vst.msk [vmem:[%s176 + $0x40] sm:$0xff] %vm184, 0.0
        %194 = vst.msk [vmem:[%s176 + $0x48] sm:$0xff] %vm184, 0.0
        %195 = vst.msk [vmem:[%s176 + $0x50] sm:$0xff] %vm184, 0.0
        %196 = vst.msk [vmem:[%s176 + $0x58] sm:$0xff] %vm184, 0.0
        %197 = vst.msk [vmem:[%s176 + $0x60] sm:$0xff] %vm184, 0.0
        %198 = vst.msk [vmem:[%s176 + $0x68] sm:$0xff] %vm184, 0.0
        %199 = vst.msk [vmem:[%s176 + $0x70] sm:$0xff] %vm184, 0.0
        %200 = vst.msk [vmem:[%s176 + $0x78] sm:$0xff] %vm184, 0.0
      $region32: #{tpu_custom_call.1} parent=27 // pred_fallthru
        _
      %v201 = vld [vmem:[%s165] sm:$0xff]
      %v202 = vld [vmem:[%s165 + $0x8] sm:$0xff]
      %v203 = vld [vmem:[%s165 + $0x10] sm:$0xff]
      %v204 = vld [vmem:[%s165 + $0x18] sm:$0xff]
      %v205 = vld [vmem:[%s165 + $0x20] sm:$0xff]
      %v206 = vld [vmem:[%s165 + $0x28] sm:$0xff]
      %v207 = vld [vmem:[%s165 + $0x30] sm:$0xff]
      %v208 = vld [vmem:[%s165 + $0x38] sm:$0xff]
      %v209 = vld [vmem:[%s165 + $0x40] sm:$0xff]
      %v210 = vld [vmem:[%s165 + $0x48] sm:$0xff]
      %v211 = vld [vmem:[%s165 + $0x50] sm:$0xff]
      %v212 = vld [vmem:[%s165 + $0x58] sm:$0xff]
      %v213 = vld [vmem:[%s165 + $0x60] sm:$0xff]
      %v214 = vld [vmem:[%s165 + $0x68] sm:$0xff]
      %v215 = vld [vmem:[%s165 + $0x70] sm:$0xff]
      %v216 = vld [vmem:[%s165 + $0x78] sm:$0xff]
      %s217 = smul.u32 %s17, 128
      %v218 = vlaneseq
      %v219 = vshrl.u32 %v218, 7
      %v220 = vadd.s32 %v219, 8
      %v221 = vadd.s32 %v219, 16
      %v222 = vadd.s32 %v219, 24
      %v223 = vadd.s32 %v219, 32
      %v224 = vadd.s32 %v219, 40
      %v225 = vadd.s32 %v219, 48
      %v226 = vadd.s32 %v219, 56
      %v227 = vadd.s32 %v219, 64
      %v228 = vadd.s32 %v219, 72
      %v229 = vadd.s32 %v219, 80
      %v230 = vadd.s32 %v219, 88
      %v231 = vadd.s32 %v219, 96
      %v232 = vadd.s32 %v219, 104
      %v233 = vadd.s32 %v219, 112
      %v234 = vadd.s32 %v219, 120
      %v235 = vstv %s217
      %v236 = vadd.s32 %v235, %v219
      %v237 = vadd.s32 %v235, %v220
      %v238 = vadd.s32 %v235, %v221
      %v239 = vadd.s32 %v235, %v222
      %v240 = vadd.s32 %v235, %v223
      %v241 = vadd.s32 %v235, %v224
      %v242 = vadd.s32 %v235, %v225
      %v243 = vadd.s32 %v235, %v226
      %v244 = vadd.s32 %v235, %v227
      %v245 = vadd.s32 %v235, %v228
      %v246 = vadd.s32 %v235, %v229
      %v247 = vadd.s32 %v235, %v230
      %v248 = vadd.s32 %v235, %v231
      %v249 = vadd.s32 %v235, %v232
      %v250 = vadd.s32 %v235, %v233
      %v251 = vadd.s32 %v235, %v234
      %s252 = smul.u32 %s18, 256
      %v253 = vlaneseq
      %v254 = vand.u32 %v253, 127
      %v255 = vstv %s252
      %v256 = vadd.s32 %v255, %v254
      %v257 = vld [vmem:[%s170] sm:$0x1]
      %v258 = vstv 0
      %v259 = vadd.s32 %v256, %v258
      %v261 = vlaneseq
      %v262 = vshrl.u32 %v261, 7
      %v263 = vsub.s32 0, %v262
      %v264 = vrot.slane %v257, %v263
      %267 = vset.pattern.permute.xlu0 0
      %268 = vperm.xlu0 %267, %v201
      %v269 = vpop.permute.xlu0 %268
      %272 = vset.pattern.permute.xlu0 0
      %273 = vperm.xlu0 %272, %v202
      %v274 = vpop.permute.xlu0 %273
      %277 = vset.pattern.permute.xlu0 0
      %278 = vperm.xlu0 %277, %v203
      %v279 = vpop.permute.xlu0 %278
      %282 = vset.pattern.permute.xlu0 0
      %283 = vperm.xlu0 %282, %v204
      %v284 = vpop.permute.xlu0 %283
      %287 = vset.pattern.permute.xlu0 0
      %288 = vperm.xlu0 %287, %v205
      %v289 = vpop.permute.xlu0 %288
      %292 = vset.pattern.permute.xlu0 0
      %293 = vperm.xlu0 %292, %v206
      %v294 = vpop.permute.xlu0 %293
      %297 = vset.pattern.permute.xlu0 0
      %298 = vperm.xlu0 %297, %v207
      %v299 = vpop.permute.xlu0 %298
      %302 = vset.pattern.permute.xlu0 0
      %303 = vperm.xlu0 %302, %v208
      %v304 = vpop.permute.xlu0 %303
      %307 = vset.pattern.permute.xlu0 0
      %308 = vperm.xlu0 %307, %v209
      %v309 = vpop.permute.xlu0 %308
      %312 = vset.pattern.permute.xlu0 0
      %313 = vperm.xlu0 %312, %v210
      %v314 = vpop.permute.xlu0 %313
      %317 = vset.pattern.permute.xlu0 0
      %318 = vperm.xlu0 %317, %v211
      %v319 = vpop.permute.xlu0 %318
      %322 = vset.pattern.permute.xlu0 0
      %323 = vperm.xlu0 %322, %v212
      %v324 = vpop.permute.xlu0 %323
      %327 = vset.pattern.permute.xlu0 0
      %328 = vperm.xlu0 %327, %v213
      %v329 = vpop.permute.xlu0 %328
      %332 = vset.pattern.permute.xlu0 0
      %333 = vperm.xlu0 %332, %v214
      %v334 = vpop.permute.xlu0 %333
      %337 = vset.pattern.permute.xlu0 0
      %338 = vperm.xlu0 %337, %v215
      %v339 = vpop.permute.xlu0 %338
      %342 = vset.pattern.permute.xlu0 0
      %343 = vperm.xlu0 %342, %v216
      %v344 = vpop.permute.xlu0 %343
      %vm346 = vcmp.lt.f32.partialorder %v264, %v269
      %vm347 = vcmp.lt.f32.partialorder %v264, %v274
      %vm348 = vcmp.lt.f32.partialorder %v264, %v279
      %vm349 = vcmp.lt.f32.partialorder %v264, %v284
      %vm350 = vcmp.lt.f32.partialorder %v264, %v289
      %vm351 = vcmp.lt.f32.partialorder %v264, %v294
      %vm352 = vcmp.lt.f32.partialorder %v264, %v299
      %vm353 = vcmp.lt.f32.partialorder %v264, %v304
      %vm354 = vcmp.lt.f32.partialorder %v264, %v309
      %vm355 = vcmp.lt.f32.partialorder %v264, %v314
      %vm356 = vcmp.lt.f32.partialorder %v264, %v319
      %vm357 = vcmp.lt.f32.partialorder %v264, %v324
      %vm358 = vcmp.lt.f32.partialorder %v264, %v329
      %vm359 = vcmp.lt.f32.partialorder %v264, %v334
      %vm360 = vcmp.lt.f32.partialorder %v264, %v339
      %vm361 = vcmp.lt.f32.partialorder %v264, %v344
      %vm362 = vcmp.eq.f32.partialorder %v264, %v269
      %vm363 = vcmp.eq.f32.partialorder %v264, %v274
      %vm364 = vcmp.eq.f32.partialorder %v264, %v279
      %vm365 = vcmp.eq.f32.partialorder %v264, %v284
      %vm366 = vcmp.eq.f32.partialorder %v264, %v289
      %vm367 = vcmp.eq.f32.partialorder %v264, %v294
      %vm368 = vcmp.eq.f32.partialorder %v264, %v299
      %vm369 = vcmp.eq.f32.partialorder %v264, %v304
      %vm370 = vcmp.eq.f32.partialorder %v264, %v309
      %vm371 = vcmp.eq.f32.partialorder %v264, %v314
      %vm372 = vcmp.eq.f32.partialorder %v264, %v319
      %vm373 = vcmp.eq.f32.partialorder %v264, %v324
      %vm374 = vcmp.eq.f32.partialorder %v264, %v329
      %vm375 = vcmp.eq.f32.partialorder %v264, %v334
      %vm376 = vcmp.eq.f32.partialorder %v264, %v339
      %vm377 = vcmp.eq.f32.partialorder %v264, %v344
      %vm378 = vcmp.lt.s32.totalorder %v259, %v236
      %vm379 = vcmp.lt.s32.totalorder %v259, %v237
      %vm380 = vcmp.lt.s32.totalorder %v259, %v238
      %vm381 = vcmp.lt.s32.totalorder %v259, %v239
      %vm382 = vcmp.lt.s32.totalorder %v259, %v240
      %vm383 = vcmp.lt.s32.totalorder %v259, %v241
      %vm384 = vcmp.lt.s32.totalorder %v259, %v242
      %vm385 = vcmp.lt.s32.totalorder %v259, %v243
      %vm386 = vcmp.lt.s32.totalorder %v259, %v244
      %vm387 = vcmp.lt.s32.totalorder %v259, %v245
      %vm388 = vcmp.lt.s32.totalorder %v259, %v246
      %vm389 = vcmp.lt.s32.totalorder %v259, %v247
      %vm390 = vcmp.lt.s32.totalorder %v259, %v248
      %vm391 = vcmp.lt.s32.totalorder %v259, %v249
      %vm392 = vcmp.lt.s32.totalorder %v259, %v250
      %vm393 = vcmp.lt.s32.totalorder %v259, %v251
      %vm394 = vmand %vm362, %vm378
      %vm395 = vmand %vm363, %vm379
      %vm396 = vmand %vm364, %vm380
      %vm397 = vmand %vm365, %vm381
      %vm398 = vmand %vm366, %vm382
      %vm399 = vmand %vm367, %vm383
      %vm400 = vmand %vm368, %vm384
      %vm401 = vmand %vm369, %vm385
      %vm402 = vmand %vm370, %vm386
      %vm403 = vmand %vm371, %vm387
      %vm404 = vmand %vm372, %vm388
      %vm405 = vmand %vm373, %vm389
      %vm406 = vmand %vm374, %vm390
      %vm407 = vmand %vm375, %vm391
      %vm408 = vmand %vm376, %vm392
      %vm409 = vmand %vm377, %vm393
      %vm410 = vmor %vm346, %vm394
      %vm411 = vmor %vm347, %vm395
      %vm412 = vmor %vm348, %vm396
      %vm413 = vmor %vm349, %vm397
      %vm414 = vmor %vm350, %vm398
      %vm415 = vmor %vm351, %vm399
      %vm416 = vmor %vm352, %vm400
      %vm417 = vmor %vm353, %vm401
      %vm418 = vmor %vm354, %vm402
      %vm419 = vmor %vm355, %vm403
      %vm420 = vmor %vm356, %vm404
      %vm421 = vmor %vm357, %vm405
      %vm422 = vmor %vm358, %vm406
      %vm423 = vmor %vm359, %vm407
      %vm424 = vmor %vm360, %vm408
      %vm425 = vmor %vm361, %vm409
      %v426 = vsel %vm410, 1, 0
      %v427 = vsel %vm411, 1, 0
      %v428 = vsel %vm412, 1, 0
      %v429 = vsel %vm413, 1, 0
      %v430 = vsel %vm414, 1, 0
      %v431 = vsel %vm415, 1, 0
      %v432 = vsel %vm416, 1, 0
      %v433 = vsel %vm417, 1, 0
      %v434 = vsel %vm418, 1, 0
      %v435 = vsel %vm419, 1, 0
      %v436 = vsel %vm420, 1, 0
      %v437 = vsel %vm421, 1, 0
      %v438 = vsel %vm422, 1, 0
      %v439 = vsel %vm423, 1, 0
      %v440 = vsel %vm424, 1, 0
      %v441 = vsel %vm425, 1, 0
      %v442 = vcvt.s32.f32 %v426
      %v443 = vcvt.s32.f32 %v427
      %v444 = vcvt.s32.f32 %v428
      %v445 = vcvt.s32.f32 %v429
      %v446 = vcvt.s32.f32 %v430
      %v447 = vcvt.s32.f32 %v431
      %v448 = vcvt.s32.f32 %v432
      %v449 = vcvt.s32.f32 %v433
      %v450 = vcvt.s32.f32 %v434
      %v451 = vcvt.s32.f32 %v435
      %v452 = vcvt.s32.f32 %v436
      %v453 = vcvt.s32.f32 %v437
      %v454 = vcvt.s32.f32 %v438
      %v455 = vcvt.s32.f32 %v439
      %v456 = vcvt.s32.f32 %v440
      %v457 = vcvt.s32.f32 %v441
      %v458 = vpack.c.bf16 %v443, %v442
      %v459 = vpack.c.bf16 %v445, %v444
      %v460 = vpack.c.bf16 %v447, %v446
      %v461 = vpack.c.bf16 %v449, %v448
      %v462 = vpack.c.bf16 %v451, %v450
      %v463 = vpack.c.bf16 %v453, %v452
      %v464 = vpack.c.bf16 %v455, %v454
      %v465 = vpack.c.bf16 %v457, %v456
      %s466 = scalar_lea.vmem %s170, 1
      %v467 = vld [vmem:[%s466] sm:$0x1]
      %v468 = vstv 128
      %v469 = vadd.s32 %v256, %v468
      %v471 = vlaneseq
      %v472 = vshrl.u32 %v471, 7
      %v473 = vsub.s32 0, %v472
      %v474 = vrot.slane %v467, %v473
      %vm476 = vcmp.lt.f32.partialorder %v474, %v269
      %vm477 = vcmp.lt.f32.partialorder %v474, %v274
      %vm478 = vcmp.lt.f32.partialorder %v474, %v279
      %vm479 = vcmp.lt.f32.partialorder %v474, %v284
      %vm480 = vcmp.lt.f32.partialorder %v474, %v289
      %vm481 = vcmp.lt.f32.partialorder %v474, %v294
      %vm482 = vcmp.lt.f32.partialorder %v474, %v299
      %vm483 = vcmp.lt.f32.partialorder %v474, %v304
      %vm484 = vcmp.lt.f32.partialorder %v474, %v309
      %vm485 = vcmp.lt.f32.partialorder %v474, %v314
      %vm486 = vcmp.lt.f32.partialorder %v474, %v319
      %vm487 = vcmp.lt.f32.partialorder %v474, %v324
      %vm488 = vcmp.lt.f32.partialorder %v474, %v329
      %vm489 = vcmp.lt.f32.partialorder %v474, %v334
      %vm490 = vcmp.lt.f32.partialorder %v474, %v339
      %vm491 = vcmp.lt.f32.partialorder %v474, %v344
      %vm492 = vcmp.eq.f32.partialorder %v474, %v269
      %vm493 = vcmp.eq.f32.partialorder %v474, %v274
      %vm494 = vcmp.eq.f32.partialorder %v474, %v279
      %vm495 = vcmp.eq.f32.partialorder %v474, %v284
      %vm496 = vcmp.eq.f32.partialorder %v474, %v289
      %vm497 = vcmp.eq.f32.partialorder %v474, %v294
      %vm498 = vcmp.eq.f32.partialorder %v474, %v299
      %vm499 = vcmp.eq.f32.partialorder %v474, %v304
      %vm500 = vcmp.eq.f32.partialorder %v474, %v309
      %vm501 = vcmp.eq.f32.partialorder %v474, %v314
      %vm502 = vcmp.eq.f32.partialorder %v474, %v319
      %vm503 = vcmp.eq.f32.partialorder %v474, %v324
      %vm504 = vcmp.eq.f32.partialorder %v474, %v329
      %vm505 = vcmp.eq.f32.partialorder %v474, %v334
      %vm506 = vcmp.eq.f32.partialorder %v474, %v339
      %vm507 = vcmp.eq.f32.partialorder %v474, %v344
      %vm508 = vcmp.lt.s32.totalorder %v469, %v236
      %vm509 = vcmp.lt.s32.totalorder %v469, %v237
      %vm510 = vcmp.lt.s32.totalorder %v469, %v238
      %vm511 = vcmp.lt.s32.totalorder %v469, %v239
      %vm512 = vcmp.lt.s32.totalorder %v469, %v240
      %vm513 = vcmp.lt.s32.totalorder %v469, %v241
      %vm514 = vcmp.lt.s32.totalorder %v469, %v242
      %vm515 = vcmp.lt.s32.totalorder %v469, %v243
      %vm516 = vcmp.lt.s32.totalorder %v469, %v244
      %vm517 = vcmp.lt.s32.totalorder %v469, %v245
      %vm518 = vcmp.lt.s32.totalorder %v469, %v246
      %vm519 = vcmp.lt.s32.totalorder %v469, %v247
      %vm520 = vcmp.lt.s32.totalorder %v469, %v248
      %vm521 = vcmp.lt.s32.totalorder %v469, %v249
      %vm522 = vcmp.lt.s32.totalorder %v469, %v250
      %vm523 = vcmp.lt.s32.totalorder %v469, %v251
      %vm524 = vmand %vm492, %vm508
      %vm525 = vmand %vm493, %vm509
      %vm526 = vmand %vm494, %vm510
      %vm527 = vmand %vm495, %vm511
      %vm528 = vmand %vm496, %vm512
      %vm529 = vmand %vm497, %vm513
      %vm530 = vmand %vm498, %vm514
      %vm531 = vmand %vm499, %vm515
      %vm532 = vmand %vm500, %vm516
      %vm533 = vmand %vm501, %vm517
      %vm534 = vmand %vm502, %vm518
      %vm535 = vmand %vm503, %vm519
      %vm536 = vmand %vm504, %vm520
      %vm537 = vmand %vm505, %vm521
      %vm538 = vmand %vm506, %vm522
      %vm539 = vmand %vm507, %vm523
      %vm540 = vmor %vm476, %vm524
      %vm541 = vmor %vm477, %vm525
      %vm542 = vmor %vm478, %vm526
      %vm543 = vmor %vm479, %vm527
      %vm544 = vmor %vm480, %vm528
      %vm545 = vmor %vm481, %vm529
      %vm546 = vmor %vm482, %vm530
      %vm547 = vmor %vm483, %vm531
      %vm548 = vmor %vm484, %vm532
      %vm549 = vmor %vm485, %vm533
      %vm550 = vmor %vm486, %vm534
      %vm551 = vmor %vm487, %vm535
      %vm552 = vmor %vm488, %vm536
      %vm553 = vmor %vm489, %vm537
      %vm554 = vmor %vm490, %vm538
      %vm555 = vmor %vm491, %vm539
      %v556 = vsel %vm540, 1, 0
      %v557 = vsel %vm541, 1, 0
      %v558 = vsel %vm542, 1, 0
      %v559 = vsel %vm543, 1, 0
      %v560 = vsel %vm544, 1, 0
      %v561 = vsel %vm545, 1, 0
      %v562 = vsel %vm546, 1, 0
      %v563 = vsel %vm547, 1, 0
      %v564 = vsel %vm548, 1, 0
      %v565 = vsel %vm549, 1, 0
      %v566 = vsel %vm550, 1, 0
      %v567 = vsel %vm551, 1, 0
      %v568 = vsel %vm552, 1, 0
      %v569 = vsel %vm553, 1, 0
      %v570 = vsel %vm554, 1, 0
      %v571 = vsel %vm555, 1, 0
      %v572 = vcvt.s32.f32 %v556
      %v573 = vcvt.s32.f32 %v557
      %v574 = vcvt.s32.f32 %v558
      %v575 = vcvt.s32.f32 %v559
      %v576 = vcvt.s32.f32 %v560
      %v577 = vcvt.s32.f32 %v561
      %v578 = vcvt.s32.f32 %v562
      %v579 = vcvt.s32.f32 %v563
      %v580 = vcvt.s32.f32 %v564
      %v581 = vcvt.s32.f32 %v565
      %v582 = vcvt.s32.f32 %v566
      %v583 = vcvt.s32.f32 %v567
      %v584 = vcvt.s32.f32 %v568
      %v585 = vcvt.s32.f32 %v569
      %v586 = vcvt.s32.f32 %v570
      %v587 = vcvt.s32.f32 %v571
      %v588 = vpack.c.bf16 %v573, %v572
      %v589 = vpack.c.bf16 %v575, %v574
      %v590 = vpack.c.bf16 %v577, %v576
      %v591 = vpack.c.bf16 %v579, %v578
      %v592 = vpack.c.bf16 %v581, %v580
      %v593 = vpack.c.bf16 %v583, %v582
      %v594 = vpack.c.bf16 %v585, %v584
      %v595 = vpack.c.bf16 %v587, %v586
      %596 = vmatprep.subr.bf16.mxu0 0
      %597 = vmatpush1.bf16.msra.mxu0 1065369472
      %598 = vmatprep.subr.bf16.mxu0 0
      %599 = vmatpush1.bf16.msra.mxu0 1065369472
      %600 = vmatprep.subr.bf16.mxu0 0
      %601 = vmatpush1.bf16.msra.mxu0 1065369472
      %602 = vmatprep.subr.bf16.mxu0 0
      %603 = vmatpush1.bf16.msra.mxu0 1065369472
      %604 = vmatprep.subr.bf16.mxu0 0
      %605 = vmatpush1.bf16.msra.mxu0 1065369472
      %606 = vmatprep.subr.bf16.mxu0 0
      %607 = vmatpush1.bf16.msra.mxu0 1065369472
      %608 = vmatprep.subr.bf16.mxu0 0
      %609 = vmatpush1.bf16.msra.mxu0 1065369472
      %610 = vmatprep.subr.bf16.mxu0 0
      %611 = vmatpush1.bf16.msra.mxu0 1065369472
      %612 = vmatprep.subr.bf16.mxu0 0
      %613 = vmatpush1.bf16.msra.mxu0 0
      %614 = vmatprep.subr.bf16.mxu0 0
      %615 = vmatpush1.bf16.msra.mxu0 0
      %616 = vmatprep.subr.bf16.mxu0 0
      %617 = vmatpush1.bf16.msra.mxu0 0
      %618 = vmatprep.subr.bf16.mxu0 0
      %619 = vmatpush1.bf16.msra.mxu0 0
      %620 = vmatprep.subr.bf16.mxu0 0
      %621 = vmatpush1.bf16.msra.mxu0 0
      %622 = vmatprep.subr.bf16.mxu0 0
      %623 = vmatpush1.bf16.msra.mxu0 0
      %624 = vmatprep.subr.bf16.mxu0 0
      %625 = vmatpush1.bf16.msra.mxu0 0
      %626 = vmatprep.subr.bf16.mxu0 0
      %627 = vmatpush1.bf16.msra.mxu0 0
      %628 = vmatprep.mubr.bf16.mxu0 0
      %629 = vmatmul.mubr.bf16.gmra.mrb[0].mxu0 %v588
      %v630 = vpop.f32.mrb[0].mxu0
      %v631 = vadd.f32 0.0, %v630
      %v632 = vpop.f32.mrb[0].mxu0
      %v633 = vpop.f32.mrb[0].mxu0
      %v634 = vadd.f32 0.0, %v633
      %v635 = vpop.f32.mrb[0].mxu0
      %636 = vmatprep.mubr.bf16.mxu0 0
      %637 = vmatmul.mubr.bf16.gmra.mrb[0].mxu0 %v589
      %v638 = vpop.f32.mrb[0].mxu0
      %v639 = vadd.f32 0.0, %v638
      %v640 = vpop.f32.mrb[0].mxu0
      %v641 = vpop.f32.mrb[0].mxu0
      %v642 = vadd.f32 0.0, %v641
      %v643 = vpop.f32.mrb[0].mxu0
      %644 = vmatprep.mubr.bf16.mxu0 0
      %645 = vmatmul.mubr.bf16.gmra.mrb[0].mxu0 %v590
      %v646 = vpop.f32.mrb[0].mxu0
      %v647 = vadd.f32 0.0, %v646
      %v648 = vpop.f32.mrb[0].mxu0
      %v649 = vpop.f32.mrb[0].mxu0
      %v650 = vadd.f32 0.0, %v649
      %v651 = vpop.f32.mrb[0].mxu0
      %652 = vmatprep.mubr.bf16.mxu0 0
      %653 = vmatmul.mubr.bf16.gmra.mrb[0].mxu0 %v591
      %v654 = vpop.f32.mrb[0].mxu0
      %v655 = vadd.f32 0.0, %v654
      %v656 = vpop.f32.mrb[0].mxu0
      %v657 = vpop.f32.mrb[0].mxu0
      %v658 = vadd.f32 0.0, %v657
      %v659 = vpop.f32.mrb[0].mxu0
      %660 = vmatprep.mubr.bf16.mxu0 0
      %661 = vmatmul.mubr.bf16.gmra.mrb[0].mxu0 %v592
      %v662 = vpop.f32.mrb[0].mxu0
      %v663 = vadd.f32 0.0, %v662
      %v664 = vpop.f32.mrb[0].mxu0
      %v665 = vpop.f32.mrb[0].mxu0
      %v666 = vadd.f32 0.0, %v665
      %v667 = vpop.f32.mrb[0].mxu0
      %668 = vmatprep.mubr.bf16.mxu0 0
      %669 = vmatmul.mubr.bf16.gmra.mrb[0].mxu0 %v593
      %v670 = vpop.f32.mrb[0].mxu0
      %v671 = vadd.f32 0.0, %v670
      %v672 = vpop.f32.mrb[0].mxu0
      %v673 = vpop.f32.mrb[0].mxu0
      %v674 = vadd.f32 0.0, %v673
      %v675 = vpop.f32.mrb[0].mxu0
      %676 = vmatprep.mubr.bf16.mxu0 0
      %677 = vmatmul.mubr.bf16.gmra.mrb[0].mxu0 %v594
      %v678 = vpop.f32.mrb[0].mxu0
      %v679 = vadd.f32 0.0, %v678
      %v680 = vpop.f32.mrb[0].mxu0
      %v681 = vpop.f32.mrb[0].mxu0
      %v682 = vadd.f32 0.0, %v681
      %v683 = vpop.f32.mrb[0].mxu0
      %684 = vmatprep.mubr.bf16.mxu0 0
      %685 = vmatmul.mubr.bf16.gmra.mrb[0].mxu0 %v595
      %v686 = vpop.f32.mrb[0].mxu0
      %v687 = vadd.f32 0.0, %v686
      %v688 = vpop.f32.mrb[0].mxu0
      %v689 = vpop.f32.mrb[0].mxu0
      %v690 = vadd.f32 0.0, %v689
      %v691 = vpop.f32.mrb[0].mxu0
      %692 = vdwg.mxu0
      %693 = vmatprep.subr.bf16.mxu0 0
      %694 = vmatpush1.bf16.msra.mxu0 1065369472
      %695 = vmatprep.subr.bf16.mxu0 0
      %696 = vmatpush1.bf16.msra.mxu0 1065369472
      %697 = vmatprep.subr.bf16.mxu0 0
      %698 = vmatpush1.bf16.msra.mxu0 1065369472
      %699 = vmatprep.subr.bf16.mxu0 0
      %700 = vmatpush1.bf16.msra.mxu0 1065369472
      %701 = vmatprep.subr.bf16.mxu0 0
      %702 = vmatpush1.bf16.msra.mxu0 1065369472
      %703 = vmatprep.subr.bf16.mxu0 0
      %704 = vmatpush1.bf16.msra.mxu0 1065369472
      %705 = vmatprep.subr.bf16.mxu0 0
      %706 = vmatpush1.bf16.msra.mxu0 1065369472
      %707 = vmatprep.subr.bf16.mxu0 0
      %708 = vmatpush1.bf16.msra.mxu0 1065369472
      %709 = vmatprep.subr.bf16.mxu0 0
      %710 = vmatpush1.bf16.msra.mxu0 0
      %711 = vmatprep.subr.bf16.mxu0 0
      %712 = vmatpush1.bf16.msra.mxu0 0
      %713 = vmatprep.subr.bf16.mxu0 0
      %714 = vmatpush1.bf16.msra.mxu0 0
      %715 = vmatprep.subr.bf16.mxu0 0
      %716 = vmatpush1.bf16.msra.mxu0 0
      %717 = vmatprep.subr.bf16.mxu0 0
      %718 = vmatpush1.bf16.msra.mxu0 0
      %719 = vmatprep.subr.bf16.mxu0 0
      %720 = vmatpush1.bf16.msra.mxu0 0
      %721 = vmatprep.subr.bf16.mxu0 0
      %722 = vmatpush1.bf16.msra.mxu0 0
      %723 = vmatprep.subr.bf16.mxu0 0
      %724 = vmatpush1.bf16.msra.mxu0 0
      %725 = vmatprep.mubr.bf16.mxu0 0
      %726 = vmatmul.mubr.bf16.gmra.mrb[0].mxu0 %v458
      %v727 = vpop.f32.mrb[0].mxu0
      %v728 = vadd.f32 %v631, %v727
      %v729 = vpop.f32.mrb[0].mxu0
      %v730 = vpop.f32.mrb[0].mxu0
      %v731 = vadd.f32 %v634, %v730
      %v732 = vpop.f32.mrb[0].mxu0
      %733 = vmatprep.mubr.bf16.mxu0 0
      %734 = vmatmul.mubr.bf16.gmra.mrb[0].mxu0 %v459
      %v735 = vpop.f32.mrb[0].mxu0
      %v736 = vadd.f32 %v639, %v735
      %v737 = vpop.f32.mrb[0].mxu0
      %v738 = vpop.f32.mrb[0].mxu0
      %v739 = vadd.f32 %v642, %v738
      %v740 = vpop.f32.mrb[0].mxu0
      %741 = vmatprep.mubr.bf16.mxu0 0
      %742 = vmatmul.mubr.bf16.gmra.mrb[0].mxu0 %v460
      %v743 = vpop.f32.mrb[0].mxu0
      %v744 = vadd.f32 %v647, %v743
      %v745 = vpop.f32.mrb[0].mxu0
      %v746 = vpop.f32.mrb[0].mxu0
      %v747 = vadd.f32 %v650, %v746
      %v748 = vpop.f32.mrb[0].mxu0
      %749 = vmatprep.mubr.bf16.mxu0 0
      %750 = vmatmul.mubr.bf16.gmra.mrb[0].mxu0 %v461
      %v751 = vpop.f32.mrb[0].mxu0
      %v752 = vadd.f32 %v655, %v751
      %v753 = vpop.f32.mrb[0].mxu0
      %v754 = vpop.f32.mrb[0].mxu0
      %v755 = vadd.f32 %v658, %v754
      %v756 = vpop.f32.mrb[0].mxu0
      %757 = vmatprep.mubr.bf16.mxu0 0
      %758 = vmatmul.mubr.bf16.gmra.mrb[0].mxu0 %v462
      %v759 = vpop.f32.mrb[0].mxu0
      %v760 = vadd.f32 %v663, %v759
      %v761 = vpop.f32.mrb[0].mxu0
      %v762 = vpop.f32.mrb[0].mxu0
      %v763 = vadd.f32 %v666, %v762
      %v764 = vpop.f32.mrb[0].mxu0
      %765 = vmatprep.mubr.bf16.mxu0 0
      %766 = vmatmul.mubr.bf16.gmra.mrb[0].mxu0 %v463
      %v767 = vpop.f32.mrb[0].mxu0
      %v768 = vadd.f32 %v671, %v767
      %v769 = vpop.f32.mrb[0].mxu0
      %v770 = vpop.f32.mrb[0].mxu0
      %v771 = vadd.f32 %v674, %v770
      %v772 = vpop.f32.mrb[0].mxu0
      %773 = vmatprep.mubr.bf16.mxu0 0
      %774 = vmatmul.mubr.bf16.gmra.mrb[0].mxu0 %v464
      %v775 = vpop.f32.mrb[0].mxu0
      %v776 = vadd.f32 %v679, %v775
      %v777 = vpop.f32.mrb[0].mxu0
      %v778 = vpop.f32.mrb[0].mxu0
      %v779 = vadd.f32 %v682, %v778
      %v780 = vpop.f32.mrb[0].mxu0
      %781 = vmatprep.mubr.bf16.mxu0 0
      %782 = vmatmul.mubr.bf16.gmra.mrb[0].mxu0 %v465
      %v783 = vpop.f32.mrb[0].mxu0
      %v784 = vadd.f32 %v687, %v783
      %v785 = vpop.f32.mrb[0].mxu0
      %v786 = vpop.f32.mrb[0].mxu0
      %v787 = vadd.f32 %v690, %v786
      %v788 = vpop.f32.mrb[0].mxu0
      %789 = vdwg.mxu0
      %v790 = vld [vmem:[%s176] sm:$0xff]
      %v791 = vld [vmem:[%s176 + $0x8] sm:$0xff]
      %v792 = vld [vmem:[%s176 + $0x10] sm:$0xff]
      %v793 = vld [vmem:[%s176 + $0x18] sm:$0xff]
      %v794 = vld [vmem:[%s176 + $0x20] sm:$0xff]
      %v795 = vld [vmem:[%s176 + $0x28] sm:$0xff]
      %v796 = vld [vmem:[%s176 + $0x30] sm:$0xff]
      %v797 = vld [vmem:[%s176 + $0x38] sm:$0xff]
      %v798 = vld [vmem:[%s176 + $0x40] sm:$0xff]
      %v799 = vld [vmem:[%s176 + $0x48] sm:$0xff]
      %v800 = vld [vmem:[%s176 + $0x50] sm:$0xff]
      %v801 = vld [vmem:[%s176 + $0x58] sm:$0xff]
      %v802 = vld [vmem:[%s176 + $0x60] sm:$0xff]
      %v803 = vld [vmem:[%s176 + $0x68] sm:$0xff]
      %v804 = vld [vmem:[%s176 + $0x70] sm:$0xff]
      %v805 = vld [vmem:[%s176 + $0x78] sm:$0xff]
      %v806 = vadd.f32 %v790, %v728
      %v807 = vadd.f32 %v791, %v731
      %v808 = vadd.f32 %v792, %v736
      %v809 = vadd.f32 %v793, %v739
      %v810 = vadd.f32 %v794, %v744
      %v811 = vadd.f32 %v795, %v747
      %v812 = vadd.f32 %v796, %v752
      %v813 = vadd.f32 %v797, %v755
      %v814 = vadd.f32 %v798, %v760
      %v815 = vadd.f32 %v799, %v763
      %v816 = vadd.f32 %v800, %v768
      %v817 = vadd.f32 %v801, %v771
      %v818 = vadd.f32 %v802, %v776
      %v819 = vadd.f32 %v803, %v779
      %v820 = vadd.f32 %v804, %v784
      %v821 = vadd.f32 %v805, %v787
      %vm822 = vcmask 7168
      %823 = vst.msk [vmem:[%s176] sm:$0xff] %vm822, %v806
      %824 = vst.msk [vmem:[%s176 + $0x8] sm:$0xff] %vm822, %v807
      %825 = vst.msk [vmem:[%s176 + $0x10] sm:$0xff] %vm822, %v808
      %826 = vst.msk [vmem:[%s176 + $0x18] sm:$0xff] %vm822, %v809
      %827 = vst.msk [vmem:[%s176 + $0x20] sm:$0xff] %vm822, %v810
      %828 = vst.msk [vmem:[%s176 + $0x28] sm:$0xff] %vm822, %v811
      %829 = vst.msk [vmem:[%s176 + $0x30] sm:$0xff] %vm822, %v812
      %830 = vst.msk [vmem:[%s176 + $0x38] sm:$0xff] %vm822, %v813
      %831 = vst.msk [vmem:[%s176 + $0x40] sm:$0xff] %vm822, %v814
      %832 = vst.msk [vmem:[%s176 + $0x48] sm:$0xff] %vm822, %v815
      %833 = vst.msk [vmem:[%s176 + $0x50] sm:$0xff] %vm822, %v816
      %834 = vst.msk [vmem:[%s176 + $0x58] sm:$0xff] %vm822, %v817
      %835 = vst.msk [vmem:[%s176 + $0x60] sm:$0xff] %vm822, %v818
      %836 = vst.msk [vmem:[%s176 + $0x68] sm:$0xff] %vm822, %v819
      %837 = vst.msk [vmem:[%s176 + $0x70] sm:$0xff] %vm822, %v820
      %838 = vst.msk [vmem:[%s176 + $0x78] sm:$0xff] %vm822, %v821
      %s839 = smul.u32 16, %s17
      %p840 = scmp.lt.s32.totalorder %s839, 31
      %s841 = scalar_select %p840, %s839, 31
      %s842 = smul.addr %s841, 8
      %s843 = scalar_lea.vmem %s2, %s842
      // Predicated region
      $region33: #{tpu_custom_call.1} parent=27 // pred_check
        %p844 = pneg %p95
      $region34: #{tpu_custom_call.1} parent=27 // pred_check_branch
        %846 = sbr.rel (%p844) target = $region36
      $region35: #{tpu_custom_call.1} parent=27 // pred_region
        %s847 = smul.u32 16, %s17
      $region36: #{tpu_custom_call.1} parent=27 // pred_fallthru
        _
    $region28: #{tpu_custom_call.1} parent=5 // pred_fallthru
      _
    %p848 = scmp.le.s32.totalorder 2, %s8
    // Predicated region
    $region37: #{tpu_custom_call.1} parent=5 // pred_check
      %p849 = pneg %p848
    $region38: #{tpu_custom_call.1} parent=5 // pred_check_branch
      %851 = sbr.rel (%p849) target = $region40
    $region39: #{tpu_custom_call.1} parent=5 // pred_region
      %s852 = ssub.s32 %s8, 2
      // Predicated region
      $region41: #{tpu_custom_call.1} parent=39 // pred_check
        %p853 = pneg %p101
      $region42: #{tpu_custom_call.1} parent=39 // pred_check_branch
        %855 = sbr.rel (%p853) target = $region44
      $region43: #{tpu_custom_call.1} parent=39 // pred_region
        %s856 = smul.u32 16, %s19
        %p857 = scmp.lt.s32.totalorder %s856, 31
        %s858 = scalar_select %p857, %s856, 31
        %s859 = smul.addr %s858, 8
        %s860 = scalar_lea.vmem %s2, %s859
      $region44: #{tpu_custom_call.1} parent=39 // pred_fallthru
        _
    $region40: #{tpu_custom_call.1} parent=5 // pred_fallthru
      _
  $region6: #{tpu_custom_call.1} parent=0 // loop_footer
    %s12 = sadd.s32 1, %s8
  $region7: #{tpu_custom_call.1} parent=0 // loop_footer_branch
    %7 = sbr.rel target = $region3
  $region8: #{tpu_custom_call.1} parent=0 // loop_exit
    _

</llo_original>
